<compile_context>
chip_gen: v5e
topology: v5e:2x2
jax: 0.10.0
libtpu: 0.0.40
codegen_flags: <defaults>
</compile_context>

<pallas_src>
import functools

import jax
import jax.numpy as jnp
from jax import lax
from jax.experimental import pallas as pl
from jax.experimental.pallas import tpu as pltpu


# --------------------------------------------------------------------------- #
# Kernels
# --------------------------------------------------------------------------- #
def _rmsnorm_add_kernel(x_ref, sub_ref, scale_ref, o_ref, *, eps, inv_d):
    """General path: one logical row per VMEM row, reduce over the lane axis."""
    # residual = x + dropout(sublayer_output); dropout == identity in eval mode
    residual = x_ref[...].astype(jnp.float32) + sub_ref[...].astype(jnp.float32)
    ms = jnp.sum(residual * residual, axis=-1, keepdims=True) * inv_d
    inv_rms = lax.rsqrt(ms + eps)              # EUP rsqrt; avoids sqrt + divide
    o_ref[...] = (residual * inv_rms * scale_ref[...]).astype(o_ref.dtype)


def _rmsnorm_add_packed_kernel(x_ref, sub_ref, scale_ref, o_ref, *,
                               eps, inv_d, d_model, k):
    """Narrow-d_model path: k = 128 // d_model logical rows folded into the
    128-lane axis (lane-dense loads / unmasked stores). Segmented reduce is a
    static loop of masked lane reductions -> exact f32, no matmul, no reshape."""
    residual = x_ref[...].astype(jnp.float32) + sub_ref[...].astype(jnp.float32)
    sq = residual * residual
    seg_id = lax.broadcasted_iota(jnp.int32, residual.shape, 1) // d_model
    inv_wide = jnp.zeros_like(residual)
    for j in range(k):                                   # k <= 16, static unroll
        m = seg_id == j
        ms_j = jnp.sum(jnp.where(m, sq, 0.0), axis=-1, keepdims=True) * inv_d
        inv_wide = jnp.where(m, lax.rsqrt(ms_j + eps), inv_wide)
    o_ref[...] = (residual * inv_wide * scale_ref[...]).astype(o_ref.dtype)


# --------------------------------------------------------------------------- #
# Tiling / VMEM helpers
# --------------------------------------------------------------------------- #
def _vmem_capacity_bytes():
    try:
        return int(pltpu.get_tpu_info().vmem_capacity_bytes)
    except Exception:
        return 64 << 20            # conservative fallback (v7x physical VMEM)


def _pick_row_tile(rows, width, in_itemsizes, out_itemsize, row_tile, vmem_cap):
    # sublane pack: 8 rows for 32-bit, 16 for bf16, 32 for 8-bit dtypes
    pack = 8
    for it in in_itemsizes + (out_itemsize,):
        pack = max(pack, 32 // max(1, it))

    # Chip-aware per-input block target (amortizes ~0.35 us/step overhead):
    # 8 MiB on 128 MiB-VMEM parts (v5e/v6e), 6 MiB on 64 MiB parts (v7x).
    target_bytes = (8 << 20) if vmem_cap >= (100 << 20) else (6 << 20)
    max_in_itemsize = max(in_itemsizes)

    if row_tile is None:
        row_tile = max(pack, target_bytes // max(1, width * max_in_itemsize))
    row_tile = max(pack, (row_tile // pack) * pack)
    rows_rounded = ((rows + pack - 1) // pack) * pack
    row_tile = min(row_tile, rows_rounded)

    # v7x has 2 TensorCores: keep >= 2 grid steps whenever each half-block still
    # moves >= ~1 MiB per input stream (v5e/v6e have 1 TC; harmless there).
    if row_tile >= rows and rows_rounded >= 2 * pack:
        half = (((rows + 1) // 2 + pack - 1) // pack) * pack
        if half * width * max_in_itemsize >= (1 << 20):
            row_tile = min(row_tile, half)
    return row_tile


def _vmem_limit(row_tile, width, in_itemsizes, out_itemsize, vmem_cap):
    blk_elems = row_tile * width
    # double-buffered streamed blocks (2 inputs + 1 output) ...
    streamed = sum(2 * blk_elems * it for it in in_itemsizes)
    streamed += 2 * blk_elems * out_itemsize
    # ... plus the fp32 intermediates materialized by the kernel body
    # (residual and one squared/product temp), plus a little slack.
    temps = 2 * blk_elems * 4
    limit = streamed + temps + (2 << 20)
    limit = max(limit, 16 << 20)
    limit = min(limit, vmem_cap - (8 << 20))     # never exceed physical VMEM
    return int(limit)


def _launch(kernel_fn, x2, s2, scale_row, rows, width, out_dtype,
            row_tile, vmem_cap):
    in_itemsizes = (jnp.dtype(x2.dtype).itemsize, jnp.dtype(s2.dtype).itemsize)
    out_itemsize = jnp.dtype(out_dtype).itemsize
    rt = _pick_row_tile(rows, width, in_itemsizes, out_itemsize,
                        row_tile, vmem_cap)
    grid = (pl.cdiv(rows, rt),)
    vmem_limit = _vmem_limit(rt, width, in_itemsizes, out_itemsize, vmem_cap)
    return pl.pallas_call(
        kernel_fn,
        out_shape=jax.ShapeDtypeStruct((rows, width), out_dtype),
        grid_spec=pltpu.PrefetchScalarGridSpec(
            num_scalar_prefetch=0,
            grid=grid,
            in_specs=[
                pl.BlockSpec((rt, width), lambda i: (i, 0)),
                pl.BlockSpec((rt, width), lambda i: (i, 0)),
                pl.BlockSpec((1, width), lambda i: (0, 0)),
            ],
            out_specs=pl.BlockSpec((rt, width), lambda i: (i, 0)),
        ),
        compiler_params=pltpu.CompilerParams(
            dimension_semantics=("parallel",),   # shards row axis across v7x TCs
            vmem_limit_bytes=vmem_limit,
        ),
    )(x2, s2, scale_row)


# --------------------------------------------------------------------------- #
# Public wrapper
# --------------------------------------------------------------------------- #
def rmsnorm_add(x, sublayer_output, scale, *, eps=1e-6, row_tile=None):
    """Fused  scale * RMSNorm(x + dropout(sublayer_output))  (dropout == eval)."""
    assert x.shape == sublayer_output.shape, "x / sublayer_output shape mismatch"
    d_model = x.shape[-1]
    assert scale.shape == (d_model,)

    out_dtype = jnp.promote_types(x.dtype, sublayer_output.dtype)
    vmem_cap = _vmem_capacity_bytes()

    orig_shape = x.shape
    x2 = x.reshape(-1, d_model)
    s2 = sublayer_output.reshape(-1, d_model)
    rows = x2.shape[0]
    scale_f32 = scale.astype(jnp.float32)

    # Lane-packed fast path for narrow d_model (lane-dense, unmasked stores).
    k = 128 // d_model if (8 <= d_model < 128 and 128 % d_model == 0) else 1
    if k > 1 and rows % k == 0:
        width = k * d_model
        x2p = x2.reshape(rows // k, width)           # metadata-only reshapes
        s2p = s2.reshape(rows // k, width)
        scale_row = jnp.tile(scale_f32, k).reshape(1, width)
        kern = functools.partial(_rmsnorm_add_packed_kernel, eps=eps,
                                 inv_d=1.0 / d_model, d_model=d_model, k=k)
        out = _launch(kern, x2p, s2p, scale_row, rows // k, width,
                      out_dtype, row_tile, vmem_cap)
        return out.reshape(orig_shape)

    # General path (any d_model; lane dense whenever d_model % 128 == 0).
    scale_row = scale_f32.reshape(1, d_model)
    kern = functools.partial(_rmsnorm_add_kernel, eps=eps, inv_d=1.0 / d_model)
    out = _launch(kern, x2, s2, scale_row, rows, d_model,
                  out_dtype, row_tile, vmem_cap)
    return out.reshape(orig_shape)


def _reference(x, sublayer_output, scale, eps=1e-6):
    residual = x + sublayer_output           # dropout identity in eval mode
    rms = jnp.sqrt(jnp.mean(residual ** 2, axis=-1, keepdims=True) + eps)
    return scale * (residual / rms)


# --------------------------------------------------------------------------- #
# Self-test
# --------------------------------------------------------------------------- #
if __name__ == "__main__":
    key = jax.random.PRNGKey(0)
    k0, k1, k2, k3, k4, k5 = jax.random.split(key, 6)

    # 1) lane-dense main example: batch=2, seq=8, d_model=128
    x = jax.random.normal(k0, (2, 8, 128), dtype=jnp.float32)
    sub = jax.random.normal(k1, (2, 8, 128), dtype=jnp.float32)
    scale = jnp.ones((128,), dtype=jnp.float32)     # nn.Parameter(torch.ones(d))
    out = jax.block_until_ready(rmsnorm_add(x, sub, scale, eps=1e-6))
    assert out.shape == x.shape
    assert jnp.allclose(out, _reference(x, sub, scale), atol=1e-5, rtol=1e-5), \
        "mismatch vs reference (d_model=128)"

    # 2) narrow d_model=32 -> lane-packed path (k = 4)
    x32 = jax.random.normal(k2, (2, 8, 32), dtype=jnp.float32)
    s32 = jax.random.normal(k3, (2, 8, 32), dtype=jnp.float32)
    sc32 = jnp.full((32,), 0.5, dtype=jnp.float32)
    out32 = jax.block_until_ready(rmsnorm_add(x32, s32, sc32, eps=1e-6))
    assert jnp.allclose(out32, _reference(x32, s32, sc32),
                        atol=1e-5, rtol=1e-5), "mismatch vs reference (packed)"

    # 3) ragged grid: rows not a multiple of row_tile (masked last block)
    xr = jax.random.normal(k4, (20, 128), dtype=jnp.float32)
    sr = jax.random.normal(k5, (20, 128), dtype=jnp.float32)
    scr = jnp.ones((128,), dtype=jnp.float32)
    outr = jax.block_until_ready(rmsnorm_add(xr, sr, scr, eps=1e-6, row_tile=8))
    assert jnp.allclose(outr, _reference(xr, sr, scr),
                        atol=1e-5, rtol=1e-5), "mismatch vs reference (ragged)"

    print("KERNEL_OK")
</pallas_src>

<mosaic_0001>
module attributes {stable_mosaic.version = 11 : i64} {
  func.func @_rmsnorm_add_kernel(%arg0: i32, %arg1: memref<16x128xf32, #tpu.memory_space<vmem>>, %arg2: memref<16x128xf32, #tpu.memory_space<vmem>>, %arg3: memref<1x128xf32, #tpu.memory_space<vmem>>, %arg4: memref<16x128xf32, #tpu.memory_space<vmem>>) attributes {dimension_semantics = [#tpu.dimension_semantics<parallel>], iteration_bounds = array<i64: 1>, scalar_prefetch = 0 : i64, scratch_operands = 0 : i64, tpu.core_type = #tpu.core_type<tc>, window_params = [{transform_indices = @transform_0, window_bounds = array<i64: 16, 128>}, {transform_indices = @transform_1, window_bounds = array<i64: 16, 128>}, {pipeline_mode = #tpu.pipeline_mode<synchronous>, transform_indices = @transform_2, window_bounds = array<i64: 1, 128>}, {transform_indices = @transform_3, window_bounds = array<i64: 16, 128>}]} {
    %c0 = arith.constant 0 : index
    %c0_0 = arith.constant 0 : index
    %0 = vector.load %arg1[%c0, %c0_0] : memref<16x128xf32, #tpu.memory_space<vmem>>, vector<16x128xf32>
    %c0_1 = arith.constant 0 : index
    %c0_2 = arith.constant 0 : index
    %1 = vector.load %arg2[%c0_1, %c0_2] : memref<16x128xf32, #tpu.memory_space<vmem>>, vector<16x128xf32>
    %2 = arith.addf %0, %1 : vector<16x128xf32>
    %3 = arith.mulf %2, %2 : vector<16x128xf32>
    %cst = arith.constant dense<0.000000e+00> : vector<16xf32>
    %4 = vector.multi_reduction <add>, %3, %cst [1] : vector<16x128xf32> to vector<16xf32>
    %5 = vector.shape_cast %4 : vector<16xf32> to vector<16x1xf32>
    %cst_3 = arith.constant 7.812500e-03 : f32
    %6 = vector.broadcast %cst_3 : f32 to vector<16x1xf32>
    %7 = arith.mulf %5, %6 : vector<16x1xf32>
    %cst_4 = arith.constant 9.99999997E-7 : f32
    %8 = vector.broadcast %cst_4 : f32 to vector<16x1xf32>
    %9 = arith.addf %7, %8 : vector<16x1xf32>
    %10 = math.rsqrt %9 : vector<16x1xf32>
    %11 = vector.broadcast %10 : vector<16x1xf32> to vector<16x128xf32>
    %12 = arith.mulf %2, %11 : vector<16x128xf32>
    %c0_5 = arith.constant 0 : index
    %c0_6 = arith.constant 0 : index
    %13 = vector.load %arg3[%c0_5, %c0_6] : memref<1x128xf32, #tpu.memory_space<vmem>>, vector<1x128xf32>
    %14 = vector.broadcast %13 : vector<1x128xf32> to vector<16x128xf32>
    %15 = arith.mulf %12, %14 : vector<16x128xf32>
    %c0_7 = arith.constant 0 : index
    %c0_8 = arith.constant 0 : index
    %16 = vector.load %arg4[%c0_7, %c0_8] : memref<16x128xf32, #tpu.memory_space<vmem>>, vector<16x128xf32>
    tpu.vector_store %arg4[%c0_7, %c0_8], %15 {strides = array<i32>} : memref<16x128xf32, #tpu.memory_space<vmem>>, vector<16x128xf32>,
    return
  }
  func.func @transform_0(%arg0: i32) -> (i32, i32) {
    %c0_i32 = arith.constant 0 : i32
    %c0_i32_0 = arith.constant 0 : i32
    return %arg0, %c0_i32 : i32, i32
  }
  func.func @transform_1(%arg0: i32) -> (i32, i32) {
    %c0_i32 = arith.constant 0 : i32
    %c0_i32_0 = arith.constant 0 : i32
    return %arg0, %c0_i32 : i32, i32
  }
  func.func @transform_2(%arg0: i32) -> (i32, i32) {
    %c0_i32 = arith.constant 0 : i32
    %c0_i32_0 = arith.constant 0 : i32
    %c0_i32_1 = arith.constant 0 : i32
    return %c0_i32, %c0_i32_0 : i32, i32
  }
  func.func @transform_3(%arg0: i32) -> (i32, i32) {
    %c0_i32 = arith.constant 0 : i32
    %c0_i32_0 = arith.constant 0 : i32
    return %arg0, %c0_i32 : i32, i32
  }
}

</mosaic_0001>

<llo_original>
// kernel: tpu_custom_call.1
$region0: #{tpu_custom_call.1}
  #allocation0 [shape = 'u32[]', space=smem, size = 0x4, offset = 0x4, fixed_abs, tag = 'smem constant byte address 0x4 - core index']
  #allocation1 [shape = 'u32[72,128]{1,0:T(1,128)}', space=vmem, size = 0x9000, scoped, tag = 'internal scratch']
  %s0 = inlined_call_operand.hbm [shape: f32[16,128], index: 0, kind: input, shape index: {}]
  %s1 = inlined_call_operand.hbm [shape: f32[16,128], index: 1, kind: input, shape index: {}]
  %s2 = inlined_call_operand.vmem [shape: f32[1,128], index: 2, kind: input, shape index: {}]
  %s3 = inlined_call_operand.hbm [shape: f32[16,128], index: 3, kind: output, shape index: {}]
  %s4 = sld [smem:[#allocation0]]
  $region30: #{tpu_custom_call.1} parent=0
    _
  %s6 = ssub.s32 1, %s4
  %s7 = scalar_select 0, %s6, %s4
  $region1: #{tpu_custom_call.1} parent=0
    #allocation2 [shape = 'u8[8192]{0}', space=vmem, size = 0x2000, scoped, tag = 'input window, operand 0, single buffered']
    #allocation3 [shape = 's32[1]{0}', space=sflag, size = 0x4, scoped, tag = 'scoped memory for tpu_custom_call.1']
    #allocation4 [shape = 's32[1]{0}', space=sflag, size = 0x4, scoped, tag = 'scoped memory for tpu_custom_call.1']
    #allocation5 [shape = 'u8[8192]{0}', space=vmem, size = 0x2000, scoped, tag = 'input window, operand 1, single buffered']
    #allocation6 [shape = 's32[1]{0}', space=sflag, size = 0x4, scoped, tag = 'scoped memory for tpu_custom_call.1']
    #allocation7 [shape = 'u8[8192]{0}', space=vmem, size = 0x2000, scoped, tag = 'output window, operand 0, single buffered']
    %8 = vsyncpa [#allocation3], 0
    %9 = vsyncpa [#allocation6], 0
    %10 = vsyncpa [#allocation4], 0
    // Predicated region
    $region2: #{tpu_custom_call.1} parent=1 // pred_check
      _
    $region3: #{tpu_custom_call.1} parent=1 // pred_check_branch
      %12 = sbr.rel (0) target = $region5
    $region4: #{tpu_custom_call.1} parent=1 // pred_region
      %14 = vsyncadd [#allocation3], 0
      %s15 = sshll.u32 %s0, 4
      %s16 = int_to_ptr.hbm [resolvable:$true] %s15
      %s17 = sshll.u32 [#allocation2], 4
      %s18 = int_to_ptr.vmem [resolvable:$true] %s17
      %23 = dma.hbm_to_vmem [thread:$0]  %s16, 256, %s18, [#allocation3], 128, 128, 8
    $region5: #{tpu_custom_call.1} parent=1 // pred_fallthru
      _
    // Predicated region
    $region6: #{tpu_custom_call.1} parent=1 // pred_check
      _
    $region7: #{tpu_custom_call.1} parent=1 // pred_check_branch
      %25 = sbr.rel (0) target = $region9
    $region8: #{tpu_custom_call.1} parent=1 // pred_region
      %27 = vsyncadd [#allocation6], 0
      %s28 = sshll.u32 %s1, 4
      %s29 = int_to_ptr.hbm [resolvable:$true] %s28
      %s30 = sshll.u32 [#allocation5], 4
      %s31 = int_to_ptr.vmem [resolvable:$true] %s30
      %36 = dma.hbm_to_vmem [thread:$0]  %s29, 256, %s31, [#allocation6], 128, 128, 8
    $region9: #{tpu_custom_call.1} parent=1 // pred_fallthru
      _
    // Predicated region
    $region10: #{tpu_custom_call.1} parent=1 // pred_check
      _
    $region11: #{tpu_custom_call.1} parent=1 // pred_check_branch
      %38 = sbr.rel (0) target = $region13
    $region12: #{tpu_custom_call.1} parent=1 // pred_region
      _
    $region13: #{tpu_custom_call.1} parent=1 // pred_fallthru
      _
    // Predicated region
    $region14: #{tpu_custom_call.1} parent=1 // pred_check
      _
    $region15: #{tpu_custom_call.1} parent=1 // pred_check_branch
      %40 = sbr.rel (0) target = $region17
    $region16: #{tpu_custom_call.1} parent=1 // pred_region
      %42 = dma.done [#allocation3], 256
    $region17: #{tpu_custom_call.1} parent=1 // pred_fallthru
      _
    // Predicated region
    $region18: #{tpu_custom_call.1} parent=1 // pred_check
      _
    $region19: #{tpu_custom_call.1} parent=1 // pred_check_branch
      %44 = sbr.rel (0) target = $region21
    $region20: #{tpu_custom_call.1} parent=1 // pred_region
      %46 = dma.done [#allocation6], 256
    $region21: #{tpu_custom_call.1} parent=1 // pred_fallthru
      _
    %v47 = vld [vmem:[#allocation2] sm:$0xff]
    %v48 = vld [vmem:[#allocation2 + $0x8] sm:$0xff]
    %v49 = vld [vmem:[#allocation5] sm:$0xff]
    %v50 = vld [vmem:[#allocation5 + $0x8] sm:$0xff]
    %v51 = vadd.f32 %v47, %v49
    %v52 = vadd.f32 %v48, %v50
    %v53 = vmul.f32 %v51, %v51
    %v54 = vmul.f32 %v52, %v52
    %55 = vadd.xlane.f32.xlu0 %v53
    %v56 = vpop.xlane.xlu0 %55
    %57 = vadd.xlane.f32.xlu0 %v54
    %v58 = vpop.xlane.xlu0 %57
    %v59 = vmul.f32 %v56, 0.0078125
    %v60 = vmul.f32 %v58, 0.0078125
    %v61 = vadd.f32 %v59, 1e-06
    %v62 = vadd.f32 %v60, 1e-06
    %v63 = vrsqrt.pop %v61
    %v64 = vmul.f32 %v63, %v61
    %v65 = vmul.f32 %v64, %v63
    %v66 = vmul.f32 0.5, %v65
    %v67 = vsub.f32 1.5, %v66
    %v68 = vmul.f32 %v63, %v67
    %vm69 = vweird.f32 %v61
    %vm70 = vweird.f32 %v63
    %vm71 = vmor %vm69, %vm70
    %v72 = vsel %vm71, %v63, %v68
    %v73 = vrsqrt.pop %v62
    %v74 = vmul.f32 %v73, %v62
    %v75 = vmul.f32 %v74, %v73
    %v76 = vmul.f32 0.5, %v75
    %v77 = vsub.f32 1.5, %v76
    %v78 = vmul.f32 %v73, %v77
    %vm79 = vweird.f32 %v62
    %vm80 = vweird.f32 %v73
    %vm81 = vmor %vm79, %vm80
    %v82 = vsel %vm81, %v73, %v78
    %v83 = vmul.f32 %v51, %v72
    %v84 = vmul.f32 %v52, %v82
    %v85 = vld [vmem:[%s2] sm:$0x1]
    %v87 = vperm.slane %v85, 0
    %v89 = vmul.f32 %v83, %v87
    %v90 = vmul.f32 %v84, %v87
    %91 = vst [vmem:[#allocation7] sm:$0xff] %v89
    %92 = vst [vmem:[#allocation7 + $0x8] sm:$0xff] %v90
    // Predicated region
    $region22: #{tpu_custom_call.1} parent=1 // pred_check
      _
    $region23: #{tpu_custom_call.1} parent=1 // pred_check_branch
      %94 = sbr.rel (0) target = $region25
    $region24: #{tpu_custom_call.1} parent=1 // pred_region
      %96 = vsyncadd [#allocation4], 0
      %s97 = sshll.u32 [#allocation7], 4
      %s98 = int_to_ptr.vmem [resolvable:$true] %s97
      %s99 = sshll.u32 %s3, 4
      %s100 = int_to_ptr.hbm [resolvable:$true] %s99
      %105 = dma.vmem_to_hbm [thread:$0]  %s98, 256, %s100, [#allocation4], 128, 128, 8
    $region25: #{tpu_custom_call.1} parent=1 // pred_fallthru
      _
    // Predicated region
    $region26: #{tpu_custom_call.1} parent=1 // pred_check
      _
    $region27: #{tpu_custom_call.1} parent=1 // pred_check_branch
      %107 = sbr.rel (0) target = $region29
    $region28: #{tpu_custom_call.1} parent=1 // pred_region
      %109 = dma.done [#allocation4], 256
    $region29: #{tpu_custom_call.1} parent=1 // pred_fallthru
      _
    %110 = vsyncpa [#allocation3], 1
    %111 = vsyncpa [#allocation6], 1
    %112 = vsyncpa [#allocation4], 1

</llo_original>
